<compile_context>
chip_gen: v6e
topology: v6e:2x2x1
jax: 0.10.0
libtpu: 0.0.40
codegen_flags: <defaults>
</compile_context>

<pallas_src>
import jax
import jax.numpy as jnp
from jax.experimental import pallas as pl
from jax.experimental.pallas import tpu as pltpu

# Coefficients from the module's __init__ (deterministic, hardcoded Leaky-ReLU fit).
NUM_INIT = [0.029792778657264946, 0.6183735264987601, 2.323309062531321,
            3.051936237265109, 1.4854203263828845, 0.2510244961111299]
DEN_INIT = [-1.1419548357285474, 4.393159974992486, 0.8714712309957245,
            0.34719662339598834]

LANE = 128
SUBLANE = 8


def _rational_kernel(num_ref, den_ref, x_ref, o_ref):
    """Elementwise rational activation on one (block_rows, 128) tile.

    num(x) = sum_{k=0}^{5} n_k * x^k                       (Horner)
    den(x) = 1 + sum_{k=0}^{3} |d_k * x^{k+1}|
           = 1 + |x| * (|d0| + |x|*(|d1| + |x|*(|d2| + |x|*|d3|)))   (exact refactor)
    out    = num(x) / den(x)
    """
    # Hoist SMEM coefficients into scalar locals once per grid step (scalar unit),
    # so each broadcast is emitted exactly once.
    n0 = num_ref[0]; n1 = num_ref[1]; n2 = num_ref[2]
    n3 = num_ref[3]; n4 = num_ref[4]; n5 = num_ref[5]
    a0 = jnp.abs(den_ref[0]); a1 = jnp.abs(den_ref[1])
    a2 = jnp.abs(den_ref[2]); a3 = jnp.abs(den_ref[3])

    x = x_ref[...].astype(jnp.float32)
    ax = jnp.abs(x)

    # Numerator via Horner: 5 mul + 5 add per element.
    num = n4 + x * n5
    num = n3 + x * num
    num = n2 + x * num
    num = n1 + x * num
    num = n0 + x * num

    # Denominator via Horner on |x|: 4 mul + 4 add (+1 abs) per element.
    den = a2 + ax * a3
    den = a1 + ax * den
    den = a0 + ax * den
    den = 1.0 + ax * den                    # den >= 1, so the reciprocal is well-behaved

    # EUP approximate reciprocal (frees VALU slots) + one Newton refinement step:
    # rel. error ~ (2^-12)^2 ≈ 6e-8, far inside the 1e-4/1e-5 tolerance.
    r = pl.reciprocal(den, approx=True)
    r = r * (2.0 - den * r)
    o_ref[...] = (num * r).astype(o_ref.dtype)


def slow_adaptive_rational(x, numerator, denominator, *, block_rows=4096):
    """Apply the adaptive rational activation elementwise to `x` (any shape)."""
    orig_shape = x.shape
    orig_dtype = x.dtype
    itemsize = jnp.dtype(orig_dtype).itemsize
    # Sublane granularity matches the dtype's native tiling: 8 (f32), 16 (bf16), 32 (int8).
    sub = max(SUBLANE, 32 // max(itemsize, 1))
    chunk = sub * LANE

    flat = x.reshape(-1)
    n = flat.shape[0]

    # Pad only to the minimal native tile so rows stay sublane-aligned. Typical activation
    # sizes (multiples of `chunk`) take no pad / no slice round-trip at all.
    pad = (-n) % chunk
    if pad:
        # TODO(synk): ragged sizes take a padded-copy fallback (one extra HBM pass); a
        # separate tail call would avoid it but is not worth the complexity here.
        flat = jnp.pad(flat, (0, pad))
    x2d = flat.reshape(-1, LANE)
    rows = x2d.shape[0]                         # multiple of `sub`

    # Block size: as large as possible (<= block_rows) to amortize the ~0.35 us per-step
    # overhead, but split so the grid has >= 2 steps whenever the input allows it, so the
    # "parallel" axis actually shards across both TensorCores on v7x.
    if rows >= 2 * sub:
        half = (((rows + 1) // 2) + sub - 1) // sub * sub
        br = min(block_rows, half)
    else:
        br = rows
    br = min(br, rows)
    grid = pl.cdiv(rows, br)

    nelem = x2d.size
    cost = pl.CostEstimate(flops=22 * nelem,            # ~9 mul + 9 add + abs + Newton
                           transcendentals=nelem,       # one EUP reciprocal per element
                           bytes_accessed=2 * nelem * itemsize)

    out2d = pl.pallas_call(
        _rational_kernel,
        out_shape=jax.ShapeDtypeStruct(x2d.shape, orig_dtype),
        grid=(grid,),
        in_specs=[
            pl.BlockSpec(memory_space=pltpu.SMEM),      # numerator coeffs (6,)
            pl.BlockSpec(memory_space=pltpu.SMEM),      # denominator coeffs (4,)
            pl.BlockSpec((br, LANE), lambda i: (i, 0)),
        ],
        out_specs=pl.BlockSpec((br, LANE), lambda i: (i, 0)),
        compiler_params=pltpu.CompilerParams(
            dimension_semantics=("parallel",)),         # megacore-shardable stream
        cost_estimate=cost,
    )(numerator, denominator, x2d)

    out = out2d.reshape(-1)
    if pad:
        out = out[:n]
    return out.reshape(orig_shape)


def _reference(x, numerator, denominator):
    """Pure-JAX reference mirroring the PyTorch forward (vander + masked sums)."""
    max_d = 6
    pows = jnp.stack([x ** k for k in range(max_d + 1)], axis=-1)
    num = (numerator * pows[..., :6]).sum(-1)
    den = jnp.abs(denominator * pows[..., 1:5]).sum(-1) + 1.0
    return num / den


if __name__ == "__main__":
    key = jax.random.PRNGKey(0)
    # small NCHW input consistent with a conv-net activation site
    x = jax.random.normal(key, (2, 4, 16, 16), dtype=jnp.float32)

    numerator = jnp.asarray(NUM_INIT, dtype=jnp.float32)
    denominator = jnp.asarray(DEN_INIT, dtype=jnp.float32)

    # jit the wrapper so the flatten/reshape pair around the custom call stays a bitcast.
    fn = jax.jit(lambda a: slow_adaptive_rational(a, numerator, denominator))
    out = jax.block_until_ready(fn(x))

    ref = _reference(x, numerator, denominator)
    assert out.shape == x.shape and out.dtype == x.dtype
    assert jnp.allclose(out, ref, rtol=1e-4, atol=1e-5), (
        float(jnp.max(jnp.abs(out - ref))))

    print("KERNEL_OK")
</pallas_src>

<mosaic_0001>
module attributes {stable_mosaic.version = 11 : i64} {
  func.func @_rational_kernel(%arg0: i32, %arg1: memref<6xf32, #tpu.memory_space<smem>>, %arg2: memref<4xf32, #tpu.memory_space<smem>>, %arg3: memref<8x128xf32, #tpu.memory_space<vmem>>, %arg4: memref<8x128xf32, #tpu.memory_space<vmem>>) attributes {dimension_semantics = [#tpu.dimension_semantics<parallel>], iteration_bounds = array<i64: 2>, scalar_prefetch = 0 : i64, scratch_operands = 0 : i64, tpu.core_type = #tpu.core_type<tc>, window_params = [{transform_indices = @transform_0, window_bounds = array<i64: 6>}, {transform_indices = @transform_1, window_bounds = array<i64: 4>}, {transform_indices = @transform_2, window_bounds = array<i64: 8, 128>}, {transform_indices = @transform_3, window_bounds = array<i64: 8, 128>}]} {
    %c0 = arith.constant 0 : index
    %0 = memref.load %arg1[%c0] : memref<6xf32, #tpu.memory_space<smem>>
    %c1 = arith.constant 1 : index
    %1 = memref.load %arg1[%c1] : memref<6xf32, #tpu.memory_space<smem>>
    %c2 = arith.constant 2 : index
    %2 = memref.load %arg1[%c2] : memref<6xf32, #tpu.memory_space<smem>>
    %c3 = arith.constant 3 : index
    %3 = memref.load %arg1[%c3] : memref<6xf32, #tpu.memory_space<smem>>
    %c4 = arith.constant 4 : index
    %4 = memref.load %arg1[%c4] : memref<6xf32, #tpu.memory_space<smem>>
    %c5 = arith.constant 5 : index
    %5 = memref.load %arg1[%c5] : memref<6xf32, #tpu.memory_space<smem>>
    %c0_0 = arith.constant 0 : index
    %6 = memref.load %arg2[%c0_0] : memref<4xf32, #tpu.memory_space<smem>>
    %7 = math.absf %6 : f32
    %c1_1 = arith.constant 1 : index
    %8 = memref.load %arg2[%c1_1] : memref<4xf32, #tpu.memory_space<smem>>
    %9 = math.absf %8 : f32
    %c2_2 = arith.constant 2 : index
    %10 = memref.load %arg2[%c2_2] : memref<4xf32, #tpu.memory_space<smem>>
    %11 = math.absf %10 : f32
    %c3_3 = arith.constant 3 : index
    %12 = memref.load %arg2[%c3_3] : memref<4xf32, #tpu.memory_space<smem>>
    %13 = math.absf %12 : f32
    %c0_4 = arith.constant 0 : index
    %c0_5 = arith.constant 0 : index
    %14 = vector.load %arg3[%c0_4, %c0_5] : memref<8x128xf32, #tpu.memory_space<vmem>>, vector<8x128xf32>
    %15 = math.absf %14 : vector<8x128xf32>
    %16 = vector.broadcast %5 : f32 to vector<8x128xf32>
    %17 = arith.mulf %14, %16 : vector<8x128xf32>
    %18 = vector.broadcast %4 : f32 to vector<8x128xf32>
    %19 = arith.addf %18, %17 : vector<8x128xf32>
    %20 = arith.mulf %14, %19 : vector<8x128xf32>
    %21 = vector.broadcast %3 : f32 to vector<8x128xf32>
    %22 = arith.addf %21, %20 : vector<8x128xf32>
    %23 = arith.mulf %14, %22 : vector<8x128xf32>
    %24 = vector.broadcast %2 : f32 to vector<8x128xf32>
    %25 = arith.addf %24, %23 : vector<8x128xf32>
    %26 = arith.mulf %14, %25 : vector<8x128xf32>
    %27 = vector.broadcast %1 : f32 to vector<8x128xf32>
    %28 = arith.addf %27, %26 : vector<8x128xf32>
    %29 = arith.mulf %14, %28 : vector<8x128xf32>
    %30 = vector.broadcast %0 : f32 to vector<8x128xf32>
    %31 = arith.addf %30, %29 : vector<8x128xf32>
    %32 = vector.broadcast %13 : f32 to vector<8x128xf32>
    %33 = arith.mulf %15, %32 : vector<8x128xf32>
    %34 = vector.broadcast %11 : f32 to vector<8x128xf32>
    %35 = arith.addf %34, %33 : vector<8x128xf32>
    %36 = arith.mulf %15, %35 : vector<8x128xf32>
    %37 = vector.broadcast %9 : f32 to vector<8x128xf32>
    %38 = arith.addf %37, %36 : vector<8x128xf32>
    %39 = arith.mulf %15, %38 : vector<8x128xf32>
    %40 = vector.broadcast %7 : f32 to vector<8x128xf32>
    %41 = arith.addf %40, %39 : vector<8x128xf32>
    %42 = arith.mulf %15, %41 : vector<8x128xf32>
    %cst = arith.constant 1.000000e+00 : f32
    %43 = vector.broadcast %cst : f32 to vector<8x128xf32>
    %44 = arith.addf %43, %42 : vector<8x128xf32>
    %45 = tpu.reciprocal %44 {approx = true} : vector<8x128xf32> -> vector<8x128xf32>
    %46 = arith.mulf %44, %45 : vector<8x128xf32>
    %cst_6 = arith.constant 2.000000e+00 : f32
    %47 = vector.broadcast %cst_6 : f32 to vector<8x128xf32>
    %48 = arith.subf %47, %46 : vector<8x128xf32>
    %49 = arith.mulf %45, %48 : vector<8x128xf32>
    %50 = arith.mulf %31, %49 : vector<8x128xf32>
    %c0_7 = arith.constant 0 : index
    %c0_8 = arith.constant 0 : index
    %51 = vector.load %arg4[%c0_7, %c0_8] : memref<8x128xf32, #tpu.memory_space<vmem>>, vector<8x128xf32>
    tpu.vector_store %arg4[%c0_7, %c0_8], %50 {strides = array<i32>} : memref<8x128xf32, #tpu.memory_space<vmem>>, vector<8x128xf32>,
    return
  }
  func.func @transform_0(%arg0: i32) -> i32 {
    %c0_i32 = arith.constant 0 : i32
    %c0_i32_0 = arith.constant 0 : i32
    return %c0_i32 : i32
  }
  func.func @transform_1(%arg0: i32) -> i32 {
    %c0_i32 = arith.constant 0 : i32
    %c0_i32_0 = arith.constant 0 : i32
    return %c0_i32 : i32
  }
  func.func @transform_2(%arg0: i32) -> (i32, i32) {
    %c0_i32 = arith.constant 0 : i32
    %c0_i32_0 = arith.constant 0 : i32
    return %arg0, %c0_i32 : i32, i32
  }
  func.func @transform_3(%arg0: i32) -> (i32, i32) {
    %c0_i32 = arith.constant 0 : i32
    %c0_i32_0 = arith.constant 0 : i32
    return %arg0, %c0_i32 : i32, i32
  }
}

</mosaic_0001>

<llo_original>
// kernel: _lambda_.1
$region0: #{_lambda_.1}
  #allocation0 [shape = 'u32[]', space=smem, size = 0x4, offset = 0x4, fixed_abs, tag = 'smem constant byte address 0x4 - core index']
  #allocation1 [shape = 'u32[144,128]{1,0:T(1,128)}', space=vmem, size = 0x12000, scoped, tag = 'internal scratch']
  %s0 = inlined_call_operand.vmem [shape: f32[6], index: 0, kind: input, shape index: {}]
  %s1 = inlined_call_operand.vmem [shape: f32[4], index: 1, kind: input, shape index: {}]
  %s2 = inlined_call_operand.vmem [shape: f32[16,128], index: 2, kind: input, shape index: {}]
  %s3 = inlined_call_operand.vmem [shape: f32[16,128], index: 3, kind: output, shape index: {}]
  %s4 = sld [smem:[#allocation0]]
  $region53: #{_lambda_.1} parent=0
    _
  %s6 = ssub.s32 1, %s4
  %s7 = scalar_select 0, %s6, %s4
  $region1: #{_lambda_.1} parent=0
    #allocation2 [shape = 'u8[512]{0}', space=smem, size = 0x200, scoped, tag = 'input window, operand 0, single buffered']
    #allocation3 [shape = 's32[2]{0}', space=sflag, size = 0x8, scoped, tag = 'scoped memory for _lambda_.1']
    #allocation4 [shape = 'u8[512]{0}', space=smem, size = 0x200, scoped, tag = 'input window, operand 1, single buffered']
    #allocation5 [shape = 's32[1]{0}', space=sflag, size = 0x4, scoped, tag = 'scoped memory for _lambda_.1']
    %8 = vsyncpa [#allocation3], 0
    %9 = vsyncpa [#allocation5], 0
    loop: start=0, step=1, limit=4
    $region2: #{_lambda_.1} parent=1 // loop_pre_header
      _
    $region3: #{_lambda_.1} parent=1 // loop_header
      %s11 = sphi 0, %s15
      %p12 = scmp.ge.s32.totalorder %s11, 4
      %s19 = sphi 0, %s19
      %s21 = sphi 0, %s19
      %s22 = sphi 0, %s21
      %s36 = sphi 0, %s22
      %s40 = sphi 0, %s40
      %s42 = sphi 0, %s40
      %s43 = sphi 0, %s42
      %s57 = sphi 0, %s43
      %s63 = sphi 0, %s65
      %s66 = sphi 0, %s63
      %s67 = sphi 0, %s66
      %s83 = sphi 0, %s67
      %s89 = sphi 0, %s91
      %s92 = sphi 0, %s89
      %s93 = sphi 0, %s92
      %s109 = sphi 0, %s93
    $region4: #{_lambda_.1} parent=1 // loop_header_branch
      %14 = sbr.rel (%p12) target = $region8
    $region5: #{_lambda_.1} parent=1 // loop_body
      %s16 = ssub.s32 %s11, 1
      %s17 = ssub.s32 %s11, 2
      %s18 = sadd.s32 %s11, 1
      %s20 = sadd.s32 %s19, 1
      %p23 = scmp.eq.s32.totalorder %s11, 1
      %p24 = scmp.ne.s32.totalorder %s19, %s21
      %p25 = scmp.eq.s32.totalorder %s11, 0
      %p26 = por %p24, %p25
      %p27 = scmp.ne.s32.totalorder %s19, %s21
      %p28 = scmp.eq.s32.totalorder %s16, 1
      %p29 = por %p27, %p28
      %p30 = scmp.ne.s32.totalorder %s21, %s22
      %p31 = scmp.eq.s32.totalorder %s16, 0
      %p32 = por %p30, %p31
      %p33 = scmp.ne.s32.totalorder %s21, %s22
      %p34 = scmp.eq.s32.totalorder %s17, 1
      %p35 = por %p33, %p34
      %p37 = scmp.ne.s32.totalorder %s22, %s36
      %p38 = scmp.eq.s32.totalorder %s17, 0
      %p39 = por %p37, %p38
      %s41 = sadd.s32 %s40, 1
      %p44 = scmp.eq.s32.totalorder %s11, 1
      %p45 = scmp.ne.s32.totalorder %s40, %s42
      %p46 = scmp.eq.s32.totalorder %s11, 0
      %p47 = por %p45, %p46
      %p48 = scmp.ne.s32.totalorder %s40, %s42
      %p49 = scmp.eq.s32.totalorder %s16, 1
      %p50 = por %p48, %p49
      %p51 = scmp.ne.s32.totalorder %s42, %s43
      %p52 = scmp.eq.s32.totalorder %s16, 0
      %p53 = por %p51, %p52
      %p54 = scmp.ne.s32.totalorder %s42, %s43
      %p55 = scmp.eq.s32.totalorder %s17, 1
      %p56 = por %p54, %p55
      %p58 = scmp.ne.s32.totalorder %s43, %s57
      %p59 = scmp.eq.s32.totalorder %s17, 0
      %p60 = por %p58, %p59
      %s61 = ssub.s32 %s11, %s18
      %p62 = scmp.eq.s32.totalorder %s61, 0
      %s64 = sadd.s32 %s63, 1
      %s65 = scalar_select %p62, %s63, %s64
      %p68 = pneg %p62
      %p69 = scmp.eq.s32.totalorder %s11, 1
      %p70 = por %p68, %p69
      %p71 = scmp.ne.s32.totalorder %s63, %s66
      %p72 = scmp.eq.s32.totalorder %s11, 0
      %p73 = por %p71, %p72
      %p74 = scmp.ne.s32.totalorder %s63, %s66
      %p75 = scmp.eq.s32.totalorder %s16, 1
      %p76 = por %p74, %p75
      %p77 = scmp.ne.s32.totalorder %s66, %s67
      %p78 = scmp.eq.s32.totalorder %s16, 0
      %p79 = por %p77, %p78
      %p80 = scmp.ne.s32.totalorder %s66, %s67
      %p81 = scmp.eq.s32.totalorder %s17, 1
      %p82 = por %p80, %p81
      %p84 = scmp.ne.s32.totalorder %s67, %s83
      %p85 = scmp.eq.s32.totalorder %s17, 0
      %p86 = por %p84, %p85
      %s87 = ssub.s32 %s11, %s18
      %p88 = scmp.eq.s32.totalorder %s87, 0
      %s90 = sadd.s32 %s89, 1
      %s91 = scalar_select %p88, %s89, %s90
      %p94 = pneg %p88
      %p95 = scmp.eq.s32.totalorder %s11, 1
      %p96 = por %p94, %p95
      %p97 = scmp.ne.s32.totalorder %s89, %s92
      %p98 = scmp.eq.s32.totalorder %s11, 0
      %p99 = por %p97, %p98
      %p100 = scmp.ne.s32.totalorder %s89, %s92
      %p101 = scmp.eq.s32.totalorder %s16, 1
      %p102 = por %p100, %p101
      %p103 = scmp.ne.s32.totalorder %s92, %s93
      %p104 = scmp.eq.s32.totalorder %s16, 0
      %p105 = por %p103, %p104
      %p106 = scmp.ne.s32.totalorder %s92, %s93
      %p107 = scmp.eq.s32.totalorder %s17, 1
      %p108 = por %p106, %p107
      %p110 = scmp.ne.s32.totalorder %s93, %s109
      %p111 = scmp.eq.s32.totalorder %s17, 0
      %p112 = por %p110, %p111
      %p113 = scmp.le.s32.totalorder 1, %s11
      %p114 = scmp.lt.s32.totalorder %s11, 3
      %p115 = pnand %p113, %p114
      %p116 = pneg %p115
      // Predicated region
      $region9: #{_lambda_.1} parent=5 // pred_check
        _
      $region10: #{_lambda_.1} parent=5 // pred_check_branch
        %118 = sbr.rel (%p115) target = $region12
      $region11: #{_lambda_.1} parent=5 // pred_region
        %s119 = ssub.s32 %s11, 1
        // Predicated region
        $region13: #{_lambda_.1} parent=11 // pred_check
          %p120 = pneg %p32
        $region14: #{_lambda_.1} parent=11 // pred_check_branch
          %122 = sbr.rel (%p120) target = $region16
        $region15: #{_lambda_.1} parent=11 // pred_region
          %s124 = ssub.s32 16, 16
          %125 = vsyncadd [#allocation3], %s124
          %s127 = sshll.u32 %s0, 4
          %s128 = int_to_ptr.vmem [resolvable:$true] %s127
          %130 = dma.vmem_to_smem %s128, 16, [#allocation2], [#allocation3]
        $region16: #{_lambda_.1} parent=11 // pred_fallthru
          _
        // Predicated region
        $region17: #{_lambda_.1} parent=11 // pred_check
          %p131 = pneg %p53
        $region18: #{_lambda_.1} parent=11 // pred_check_branch
          %133 = sbr.rel (%p131) target = $region20
        $region19: #{_lambda_.1} parent=11 // pred_region
          %s135 = ssub.s32 16, 16
          %136 = vsyncadd [#allocation5], %s135
          %s138 = sshll.u32 %s1, 4
          %s139 = int_to_ptr.vmem [resolvable:$true] %s138
          %141 = dma.vmem_to_smem %s139, 16, [#allocation4], [#allocation5]
        $region20: #{_lambda_.1} parent=11 // pred_fallthru
          _
      $region12: #{_lambda_.1} parent=5 // pred_fallthru
        _
      %p142 = scmp.lt.s32.totalorder %s11, 2
      // Predicated region
      $region21: #{_lambda_.1} parent=5 // pred_check
        %p143 = pneg %p142
      $region22: #{_lambda_.1} parent=5 // pred_check_branch
        %145 = sbr.rel (%p143) target = $region24
      $region23: #{_lambda_.1} parent=5 // pred_region
        // Predicated region
        $region25: #{_lambda_.1} parent=23 // pred_check
          %p146 = pneg %p73
        $region26: #{_lambda_.1} parent=23 // pred_check_branch
          %148 = sbr.rel (%p146) target = $region28
        $region27: #{_lambda_.1} parent=23 // pred_region
          %p149 = scmp.lt.s32.totalorder %s11, 1
          %s150 = scalar_select %p149, %s11, 1
          %s151 = smul.addr %s150, 8
          %s152 = scalar_lea.vmem %s2, %s151
        $region28: #{_lambda_.1} parent=23 // pred_fallthru
          _
      $region24: #{_lambda_.1} parent=5 // pred_fallthru
        _
      %p153 = scmp.le.s32.totalorder 1, %s11
      %p154 = scmp.lt.s32.totalorder %s11, 3
      %p155 = pnand %p153, %p154
      %p156 = pneg %p155
      // Predicated region
      $region29: #{_lambda_.1} parent=5 // pred_check
        _
      $region30: #{_lambda_.1} parent=5 // pred_check_branch
        %158 = sbr.rel (%p155) target = $region32
      $region31: #{_lambda_.1} parent=5 // pred_region
        %s159 = ssub.s32 %s11, 1
        // Predicated region
        $region33: #{_lambda_.1} parent=31 // pred_check
          %p160 = pneg %p32
        $region34: #{_lambda_.1} parent=31 // pred_check_branch
          %162 = sbr.rel (%p160) target = $region36
        $region35: #{_lambda_.1} parent=31 // pred_region
          %163 = dma.done [#allocation3], 16
        $region36: #{_lambda_.1} parent=31 // pred_fallthru
          _
        // Predicated region
        $region37: #{_lambda_.1} parent=31 // pred_check
          %p164 = pneg %p53
        $region38: #{_lambda_.1} parent=31 // pred_check_branch
          %166 = sbr.rel (%p164) target = $region40
        $region39: #{_lambda_.1} parent=31 // pred_region
          %167 = dma.done [#allocation5], 16
        $region40: #{_lambda_.1} parent=31 // pred_fallthru
          _
        %168 = sfence
        %p169 = pneg %p32
        %p170 = pneg %p29
        %p171 = pneg %p53
        %p172 = pneg %p50
        %p173 = scmp.lt.s32.totalorder %s16, 1
        %s174 = scalar_select %p173, %s16, 1
        %s175 = smul.addr %s174, 8
        %s176 = scalar_lea.vmem %s2, %s175
        %p177 = pneg %p79
        %p178 = pneg %p76
        %p179 = pneg %p105
        %p180 = pneg %p102
        %p181 = scmp.lt.s32.totalorder %s16, 1
        %s182 = scalar_select %p181, %s16, 1
        %s183 = smul.addr %s182, 8
        %s184 = scalar_lea.vmem %s3, %s183
        %p185 = scmp.lt.s32.totalorder %s16, 1
        %s186 = scalar_select %p185, %s16, 1
        %s187 = smul.addr %s186, 8
        %s188 = scalar_lea.vmem %s2, %s187
        %p189 = scmp.lt.s32.totalorder %s16, 1
        %s190 = scalar_select %p189, %s16, 1
        %s191 = smul.addr %s190, 8
        %s192 = scalar_lea.vmem %s3, %s191
        %s193 = sld [smem:[#allocation2]]
        %s194 = sld [smem:[#allocation2 + $0x1]]
        %s195 = sld [smem:[#allocation2 + $0x2]]
        %s196 = sld [smem:[#allocation2 + $0x3]]
        %s197 = sld [smem:[#allocation2 + $0x4]]
        %s198 = sld [smem:[#allocation2 + $0x5]]
        %s199 = sld [smem:[#allocation4]]
        %s200 = sand.u32 2147483647, %s199
        %s201 = sld [smem:[#allocation4 + $0x1]]
        %s202 = sand.u32 2147483647, %s201
        %s203 = sld [smem:[#allocation4 + $0x2]]
        %s204 = sand.u32 2147483647, %s203
        %s205 = sld [smem:[#allocation4 + $0x3]]
        %s206 = sand.u32 2147483647, %s205
        %v207 = vld [vmem:[%s188] sm:$0xff]
        %v208 = vand.u32 2147483647, %v207
        %v209 = vstv %s198
        %v210 = vmul.f32 %v207, %v209
        %v211 = vstv %s197
        %v212 = vadd.f32 %v211, %v210
        %v213 = vmul.f32 %v207, %v212
        %v214 = vstv %s196
        %v215 = vadd.f32 %v214, %v213
        %v216 = vmul.f32 %v207, %v215
        %v217 = vstv %s195
        %v218 = vadd.f32 %v217, %v216
        %v219 = vmul.f32 %v207, %v218
        %v220 = vstv %s194
        %v221 = vadd.f32 %v220, %v219
        %v222 = vmul.f32 %v207, %v221
        %v223 = vstv %s193
        %v224 = vadd.f32 %v223, %v222
        %v225 = vstv %s206
        %v226 = vmul.f32 %v208, %v225
        %v227 = vstv %s204
        %v228 = vadd.f32 %v227, %v226
        %v229 = vmul.f32 %v208, %v228
        %v230 = vstv %s202
        %v231 = vadd.f32 %v230, %v229
        %v232 = vmul.f32 %v208, %v231
        %v233 = vstv %s200
        %v234 = vadd.f32 %v233, %v232
        %v235 = vmul.f32 %v208, %v234
        %v236 = vadd.f32 %v235, 1.0
        %v237 = vrcp.pop %v236
        %v238 = vmul.f32 %v236, %v237
        %v239 = vsub.f32 2.0, %v238
        %v240 = vmul.f32 %v237, %v239
        %v241 = vmul.f32 %v224, %v240
        %242 = vst [vmem:[%s192] sm:$0xff] %v241
        %p243 = scmp.lt.s32.totalorder %s16, 1
        %s244 = scalar_select %p243, %s16, 1
        %s245 = smul.addr %s244, 8
        %s246 = scalar_lea.vmem %s3, %s245
        // Predicated region
        $region41: #{_lambda_.1} parent=31 // pred_check
          %p247 = pneg %p102
        $region42: #{_lambda_.1} parent=31 // pred_check_branch
          %249 = sbr.rel (%p247) target = $region44
        $region43: #{_lambda_.1} parent=31 // pred_region
          _
        $region44: #{_lambda_.1} parent=31 // pred_fallthru
          _
      $region32: #{_lambda_.1} parent=5 // pred_fallthru
        _
      %p250 = scmp.le.s32.totalorder 2, %s11
      // Predicated region
      $region45: #{_lambda_.1} parent=5 // pred_check
        %p251 = pneg %p250
      $region46: #{_lambda_.1} parent=5 // pred_check_branch
        %253 = sbr.rel (%p251) target = $region48
      $region47: #{_lambda_.1} parent=5 // pred_region
        %s254 = ssub.s32 %s11, 2
        // Predicated region
        $region49: #{_lambda_.1} parent=47 // pred_check
          %p255 = pneg %p108
        $region50: #{_lambda_.1} parent=47 // pred_check_branch
          %257 = sbr.rel (%p255) target = $region52
        $region51: #{_lambda_.1} parent=47 // pred_region
          %p258 = scmp.lt.s32.totalorder %s17, 1
          %s259 = scalar_select %p258, %s17, 1
          %s260 = smul.addr %s259, 8
          %s261 = scalar_lea.vmem %s3, %s260
        $region52: #{_lambda_.1} parent=47 // pred_fallthru
          _
      $region48: #{_lambda_.1} parent=5 // pred_fallthru
        _
    $region6: #{_lambda_.1} parent=1 // loop_footer
      %s15 = sadd.s32 1, %s11
    $region7: #{_lambda_.1} parent=1 // loop_footer_branch
      %10 = sbr.rel target = $region3
    $region8: #{_lambda_.1} parent=1 // loop_exit
      _
    %262 = vsyncpa [#allocation3], 1
    %s263 = scalar_lea.sflag [#allocation3], 1
    %264 = vsyncpa %s263, 1
    %265 = vsyncpa [#allocation5], 1

</llo_original>
